<compile_context>
chip_gen: v6e
topology: v6e:2x2x1
jax: 0.10.0
libtpu: 0.0.40
codegen_flags: <defaults>
</compile_context>

<pallas_src>
import functools

import jax
import jax.numpy as jnp
from jax.experimental import pallas as pl
from jax.experimental.pallas import tpu as pltpu

BN_EPS = 1e-5


def _round_up(x, m):
    return ((x + m - 1) // m) * m


# ---------------------------------------------------------------------------
# Kernel 1: per-relation message matmul + one-hot scatter-reduce to node tiles
# grid = (node_tiles, nr).  The (TN, Dout) output tile's block index is
# constant across the relation (reduction) axis, so it stays VMEM-resident
# and is accumulated in place.
# ---------------------------------------------------------------------------
def agg_kernel(h_ref, w_ref, s_ref, out_ref):
    r = pl.program_id(1)

    @pl.when(r == 0)
    def _init():
        out_ref[...] = jnp.zeros_like(out_ref)

    # per-edge messages for relation r: (Ept_pad, Dout_pad), bf16 MXU, f32 acc
    msg = jnp.dot(h_ref[0], w_ref[0], preferred_element_type=jnp.float32)
    # scatter-add to this node tile via exact 0/1 one-hot matmul (bf16 MXU)
    out_ref[...] += jnp.dot(s_ref[0], msg.astype(jnp.bfloat16),
                            preferred_element_type=jnp.float32)


# ---------------------------------------------------------------------------
# Kernel 2: BatchNorm1d (training-mode batch stats, gamma=1 / beta=0) + tanh.
# Runs once over the full padded (N_pad, Dout_pad) array; padded rows are all
# zero and are masked out of the statistics.
# TODO(synk): for very large N this should become a tiled two-moment
#             accumulation pass followed by a normalize pass.
# ---------------------------------------------------------------------------
def bn_tanh_kernel(x_ref, out_ref, *, n_valid):
    x = x_ref[...]
    row = jax.lax.broadcasted_iota(jnp.int32, x.shape, 0)
    valid = row < n_valid
    inv_n = 1.0 / float(n_valid)
    mean = jnp.sum(x, axis=0, keepdims=True) * inv_n       # padded rows are 0
    cent = jnp.where(valid, x - mean, 0.0)
    var = jnp.sum(cent * cent, axis=0, keepdims=True) * inv_n
    # TODO(synk): dropout p=0.0 here; nonzero dropout needs pltpu.prng_* masks.
    out_ref[...] = jnp.tanh((x - mean) * jax.lax.rsqrt(var + BN_EPS))


def my_compgcn_forward(node_feat, edge_feat, W_R, W_rel, src, dst, etype_norm,
                       *, n_nodes, e_per_type, node_tile=256):
    """node_feat: (N, D_in), edge_feat: (nr, D_in), W_R: (nr, D_in, D_out),
    W_rel: (D_in, D_out). Edges sorted by etype, e_per_type per relation.
    node_tile: sweep 512-1024 on v5e/v6e (128 MiB VMEM), ~halve on v7x."""
    nr, d_in, d_out = W_R.shape
    N = n_nodes
    Ept = e_per_type

    f32, bf16 = jnp.float32, jnp.bfloat16

    # Padded sizes: feature / edge dims to 128 (lane-dense stores, MXU feed),
    # node dim to a multiple of the node tile.
    d_in_p = _round_up(d_in, 128)
    d_out_p = _round_up(d_out, 128)
    ept_p = _round_up(Ept, 128)
    tn = node_tile
    n_p = _round_up(max(N, 8), tn)
    n_tiles = n_p // tn

    # --- glue (plain JAX): fold composition + norm, build one-hot scatter ---
    # 'mult' composition folded into the weights: (h*eh)@W_R[r] == h@(eh⊙W_R[r])
    w_prime = edge_feat[:, :, None] * W_R                        # (nr, Din, Dout)
    w_prime = jnp.pad(w_prime, ((0, 0), (0, d_in_p - d_in),
                                (0, d_out_p - d_out))).astype(bf16)

    # Per-edge norm folded into the gathered source rows (keeps S exact 0/1).
    h_src = (node_feat[src] * etype_norm[:, None]).reshape(nr, Ept, d_in)
    h_src = jnp.pad(h_src, ((0, 0), (0, ept_p - Ept),
                            (0, d_in_p - d_in))).astype(bf16)

    # S[r, n, e] = 1 iff dst of edge e (of relation r) == n; built directly in
    # (nr, N_pad, Ept_pad) layout, bf16 (0/1 exactly representable).
    dst_g = jnp.full((nr, ept_p), -1, jnp.int32).at[:, :Ept].set(
        dst.reshape(nr, Ept).astype(jnp.int32))
    node_ids = jnp.arange(n_p, dtype=jnp.int32)
    S = (dst_g[:, None, :] == node_ids[None, :, None]).astype(bf16)

    flops = (2 * n_tiles * nr * ept_p * d_in_p * d_out_p       # message matmuls
             + 2 * nr * n_p * ept_p * d_out_p)                 # scatter matmuls
    bytes_accessed = (2 * S.size                               # bf16 stream
                      + 2 * n_tiles * (h_src.size + w_prime.size)
                      + 4 * n_p * d_out_p)

    # --- hot path: aggregation kernel ---------------------------------------
    agg = pl.pallas_call(
        agg_kernel,
        out_shape=jax.ShapeDtypeStruct((n_p, d_out_p), f32),
        grid_spec=pltpu.PrefetchScalarGridSpec(
            num_scalar_prefetch=0,
            grid=(n_tiles, nr),
            in_specs=[
                pl.BlockSpec((1, ept_p, d_in_p), lambda n, r: (r, 0, 0)),
                pl.BlockSpec((1, d_in_p, d_out_p), lambda n, r: (r, 0, 0)),
                pl.BlockSpec((1, tn, ept_p), lambda n, r: (r, n, 0)),
            ],
            out_specs=pl.BlockSpec((tn, d_out_p), lambda n, r: (n, 0)),
        ),
        compiler_params=pltpu.CompilerParams(
            dimension_semantics=("parallel", "arbitrary"),
            vmem_limit_bytes=48 * 1024 * 1024),
        cost_estimate=pl.CostEstimate(flops=int(flops), transcendentals=0,
                                      bytes_accessed=int(bytes_accessed)),
    )(h_src, w_prime, S)

    # --- finalize: batch-norm (full-N stats) + tanh --------------------------
    node_out = pl.pallas_call(
        functools.partial(bn_tanh_kernel, n_valid=N),
        out_shape=jax.ShapeDtypeStruct((n_p, d_out_p), f32),
    )(agg)[:N, :d_out]

    # Tiny (nr, Din) @ (Din, Dout): not worth a separate pallas_call launch.
    rel_out = jnp.dot(edge_feat, W_rel, preferred_element_type=f32)
    return node_out, rel_out


def _reference(node_feat, edge_feat, W_R, W_rel, src, dst, etype, etype_norm,
               n_nodes):
    comp = node_feat[src] * edge_feat[etype]
    msg = jnp.einsum('ed,edo->eo', comp, W_R[etype]) * etype_norm[:, None]
    h = jax.ops.segment_sum(msg, dst, num_segments=n_nodes)
    mean = h.mean(0, keepdims=True)
    var = ((h - mean) ** 2).mean(0, keepdims=True)
    return jnp.tanh((h - mean) / jnp.sqrt(var + BN_EPS)), edge_feat @ W_rel


if __name__ == "__main__":
    # Small deterministic problem
    N, D_IN, D_OUT, NR, E_PT = 16, 32, 32, 4, 8
    E = NR * E_PT

    key = jax.random.PRNGKey(0)
    k_nf, k_ef, k_wr, k_wrel, k_src, k_dst = jax.random.split(key, 6)

    node_feat = jax.random.normal(k_nf, (N, D_IN), dtype=jnp.float32)
    edge_feat = jax.random.normal(k_ef, (NR, D_IN), dtype=jnp.float32)

    # xavier_normal-style init (deterministic). The module's `bias` parameter
    # is unused in forward(), so it is omitted here.
    std = (2.0 / (D_IN + D_OUT)) ** 0.5
    W_R = std * jax.random.normal(k_wr, (NR, D_IN, D_OUT), dtype=jnp.float32)
    W_rel = std * jax.random.normal(k_wrel, (D_IN, D_OUT), dtype=jnp.float32)

    # Graph: edges sorted by etype, E_PT edges per relation
    src = jax.random.randint(k_src, (E,), 0, N)
    dst = jax.random.randint(k_dst, (E,), 0, N)
    etype = jnp.repeat(jnp.arange(NR), E_PT)
    in_deg = jax.ops.segment_sum(jnp.ones((E,), jnp.float32), dst,
                                 num_segments=N)
    etype_norm = 1.0 / jnp.maximum(in_deg[dst], 1.0)

    node_out, rel_out = my_compgcn_forward(
        node_feat, edge_feat, W_R, W_rel, src, dst, etype_norm,
        n_nodes=N, e_per_type=E_PT)
    jax.block_until_ready((node_out, rel_out))

    ref_node, ref_rel = _reference(node_feat, edge_feat, W_R, W_rel,
                                   src, dst, etype, etype_norm, N)
    # node path runs bf16 operands with f32 accumulation -> bf16-level tolerance
    assert jnp.allclose(node_out, ref_node, atol=3e-2, rtol=3e-2), (
        float(jnp.max(jnp.abs(node_out - ref_node))))
    assert jnp.allclose(rel_out, ref_rel, atol=1e-5, rtol=1e-5)
    print("KERNEL_OK")
</pallas_src>

<mosaic_0001>
module attributes {stable_mosaic.version = 11 : i64} {
  func.func @agg_kernel(%arg0: i32, %arg1: i32, %arg2: memref<1x128x128xbf16, #tpu.memory_space<vmem>>, %arg3: memref<1x128x128xbf16, #tpu.memory_space<vmem>>, %arg4: memref<1x256x128xbf16, #tpu.memory_space<vmem>>, %arg5: memref<256x128xf32, #tpu.memory_space<vmem>>) attributes {dimension_semantics = [#tpu.dimension_semantics<parallel>, #tpu.dimension_semantics<arbitrary>], iteration_bounds = array<i64: 1, 4>, scalar_prefetch = 0 : i64, scratch_operands = 0 : i64, tpu.core_type = #tpu.core_type<tc>, window_params = [{transform_indices = @transform_0, window_bounds = array<i64: 1, 128, 128>}, {transform_indices = @transform_1, window_bounds = array<i64: 1, 128, 128>}, {transform_indices = @transform_2, window_bounds = array<i64: 1, 256, 128>}, {transform_indices = @transform_3, window_bounds = array<i64: 256, 128>}]} {
    %c0_i32 = arith.constant 0 : i32
    %0 = arith.cmpi eq, %arg1, %c0_i32 : i32
    %1 = arith.extui %0 : i1 to i32
    %c0_i32_0 = arith.constant 0 : i32
    %2 = arith.cmpi ne, %1, %c0_i32_0 : i32
    scf.if %2 {
      %cst_14 = arith.constant 0.000000e+00 : f32
      %15 = vector.broadcast %cst_14 : f32 to vector<256x128xf32>
      %c0_15 = arith.constant 0 : index
      %c0_16 = arith.constant 0 : index
      %16 = vector.load %arg5[%c0_15, %c0_16] : memref<256x128xf32, #tpu.memory_space<vmem>>, vector<256x128xf32>
      tpu.vector_store %arg5[%c0_15, %c0_16], %15 {strides = array<i32>} : memref<256x128xf32, #tpu.memory_space<vmem>>, vector<256x128xf32>,
    } else {
    }
    %c0 = arith.constant 0 : index
    %c0_1 = arith.constant 0 : index
    %c0_2 = arith.constant 0 : index
    %3 = vector.load %arg2[%c0, %c0_1, %c0_2] : memref<1x128x128xbf16, #tpu.memory_space<vmem>>, vector<1x128x128xbf16>
    %4 = vector.shape_cast %3 : vector<1x128x128xbf16> to vector<128x128xbf16>
    %c0_3 = arith.constant 0 : index
    %c0_4 = arith.constant 0 : index
    %c0_5 = arith.constant 0 : index
    %5 = vector.load %arg3[%c0_3, %c0_4, %c0_5] : memref<1x128x128xbf16, #tpu.memory_space<vmem>>, vector<1x128x128xbf16>
    %6 = vector.shape_cast %5 : vector<1x128x128xbf16> to vector<128x128xbf16>
    %cst = arith.constant dense<0.000000e+00> : vector<128x128xf32>
    %7 = tpu.matmul %4, %6, %cst {dimension_numbers = #tpu.dot_dimension_numbers<[1], [0], [0], [1], [0, 0, 1, 1], [], []>} : vector<128x128xbf16>, vector<128x128xbf16>, vector<128x128xf32> -> vector<128x128xf32>
    %c0_6 = arith.constant 0 : index
    %c0_7 = arith.constant 0 : index
    %8 = vector.load %arg5[%c0_6, %c0_7] : memref<256x128xf32, #tpu.memory_space<vmem>>, vector<256x128xf32>
    %c0_8 = arith.constant 0 : index
    %c0_9 = arith.constant 0 : index
    %c0_10 = arith.constant 0 : index
    %9 = vector.load %arg4[%c0_8, %c0_9, %c0_10] : memref<1x256x128xbf16, #tpu.memory_space<vmem>>, vector<1x256x128xbf16>
    %10 = vector.shape_cast %9 : vector<1x256x128xbf16> to vector<256x128xbf16>
    %11 = arith.truncf %7 : vector<128x128xf32> to vector<128x128xbf16>
    %cst_11 = arith.constant dense<0.000000e+00> : vector<256x128xf32>
    %12 = tpu.matmul %10, %11, %cst_11 {dimension_numbers = #tpu.dot_dimension_numbers<[1], [0], [0], [1], [0, 0, 1, 1], [], []>} : vector<256x128xbf16>, vector<128x128xbf16>, vector<256x128xf32> -> vector<256x128xf32>
    %13 = arith.addf %8, %12 : vector<256x128xf32>
    %c0_12 = arith.constant 0 : index
    %c0_13 = arith.constant 0 : index
    %14 = vector.load %arg5[%c0_12, %c0_13] : memref<256x128xf32, #tpu.memory_space<vmem>>, vector<256x128xf32>
    tpu.vector_store %arg5[%c0_12, %c0_13], %13 {strides = array<i32>} : memref<256x128xf32, #tpu.memory_space<vmem>>, vector<256x128xf32>,
    return
  }
  func.func @transform_0(%arg0: i32, %arg1: i32) -> (i32, i32, i32) {
    %c0_i32 = arith.constant 0 : i32
    %c0_i32_0 = arith.constant 0 : i32
    %c0_i32_1 = arith.constant 0 : i32
    return %arg1, %c0_i32, %c0_i32_0 : i32, i32, i32
  }
  func.func @transform_1(%arg0: i32, %arg1: i32) -> (i32, i32, i32) {
    %c0_i32 = arith.constant 0 : i32
    %c0_i32_0 = arith.constant 0 : i32
    %c0_i32_1 = arith.constant 0 : i32
    return %arg1, %c0_i32, %c0_i32_0 : i32, i32, i32
  }
  func.func @transform_2(%arg0: i32, %arg1: i32) -> (i32, i32, i32) {
    %c0_i32 = arith.constant 0 : i32
    %c0_i32_0 = arith.constant 0 : i32
    return %arg1, %arg0, %c0_i32 : i32, i32, i32
  }
  func.func @transform_3(%arg0: i32, %arg1: i32) -> (i32, i32) {
    %c0_i32 = arith.constant 0 : i32
    %c0_i32_0 = arith.constant 0 : i32
    return %arg0, %c0_i32 : i32, i32
  }
}

</mosaic_0001>

<llo_original>
// kernel: tpu_custom_call.1
$region0: #{tpu_custom_call.1}
  #allocation0 [shape = 'u32[]', space=smem, size = 0x4, offset = 0x4, fixed_abs, tag = 'smem constant byte address 0x4 - core index']
  #allocation1 [shape = 'u32[144,128]{1,0:T(1,128)}', space=vmem, size = 0x12000, scoped, tag = 'internal scratch']
  %s0 = inlined_call_operand.hbm [shape: bf16[4,128,128], index: 0, kind: input, shape index: {}]
  %s1 = inlined_call_operand.hbm [shape: bf16[4,128,128], index: 1, kind: input, shape index: {}]
  %s2 = inlined_call_operand.hbm [shape: bf16[4,256,128], index: 2, kind: input, shape index: {}]
  %s3 = inlined_call_operand.hbm [shape: f32[256,128], index: 3, kind: output, shape index: {}]
  %s4 = sld [smem:[#allocation0]]
  $region61: #{tpu_custom_call.1} parent=0
    _
  %s6 = ssub.s32 1, %s4
  %s7 = scalar_select 0, %s6, %s4
  $region1: #{tpu_custom_call.1} parent=0
    #allocation2 [shape = 'u8[65536]{0}', space=vmem, size = 0x10000, scoped, tag = 'input window, operand 0']
    #allocation3 [shape = 's32[2]{0}', space=sflag, size = 0x8, scoped, tag = 'scoped memory for tpu_custom_call.1']
    #allocation4 [shape = 's32[2]{0}', space=sflag, size = 0x8, scoped, tag = 'scoped memory for tpu_custom_call.1']
    #allocation5 [shape = 'u8[65536]{0}', space=vmem, size = 0x10000, scoped, tag = 'input window, operand 1']
    #allocation6 [shape = 's32[2]{0}', space=sflag, size = 0x8, scoped, tag = 'scoped memory for tpu_custom_call.1']
    #allocation7 [shape = 'u8[131072]{0}', space=vmem, size = 0x20000, scoped, tag = 'input window, operand 2']
    #allocation8 [shape = 'u8[131072]{0}', space=vmem, size = 0x20000, scoped, tag = 'output window, operand 0, single buffered']
    %8 = vsyncpa [#allocation3], 0
    %s9 = scalar_lea.sflag [#allocation3], 1
    %10 = vsyncpa %s9, 0
    %11 = vsyncpa [#allocation6], 0
    %s12 = scalar_lea.sflag [#allocation6], 1
    %13 = vsyncpa %s12, 0
    %14 = vsyncpa [#allocation4], 0
    loop: start=0, step=1, limit=6
    $region2: #{tpu_custom_call.1} parent=1 // loop_pre_header
      _
    $region3: #{tpu_custom_call.1} parent=1 // loop_header
      %s16 = sphi 0, %s20
      %p17 = scmp.ge.s32.totalorder %s16, 6
      %s23 = sphi 0, %s35
      %s24 = sphi 0, %s31
      %s25 = sphi 0, %s23
      %s26 = sphi 0, %s24
      %s27 = sphi 0, %s25
      %s28 = sphi 0, %s26
      %s38 = sphi 0, %s40
      %s41 = sphi 0, %s38
      %s42 = sphi 0, %s41
      %s58 = sphi 0, %s42
      %s64 = sphi 0, %s66
      %s67 = sphi 0, %s64
      %s68 = sphi 0, %s67
      %s84 = sphi 0, %s68
      %s92 = sphi 0, %s94
      %s95 = sphi 0, %s92
      %s96 = sphi 0, %s95
      %s112 = sphi 0, %s96
      %s118 = sphi 0, %s120
      %s121 = sphi 0, %s118
      %s122 = sphi 0, %s121
      %s138 = sphi 0, %s122
    $region4: #{tpu_custom_call.1} parent=1 // loop_header_branch
      %19 = sbr.rel (%p17) target = $region8
    $region5: #{tpu_custom_call.1} parent=1 // loop_body
      %s21 = ssub.s32 %s16, 1
      %s22 = ssub.s32 %s16, 2
      %s29 = sadd.s32 1, %s24
      %p30 = scmp.ge.s32.totalorder %s29, 4
      %s31 = scalar_select %p30, 0, %s29
      %s32 = sadd.s32 1, %s23
      %s33 = scalar_select %p30, %s32, %s23
      %p34 = scmp.ge.s32.totalorder %s33, 1
      %s35 = scalar_select %p34, 0, %s33
      %s36 = ssub.s32 %s24, %s31
      %p37 = scmp.eq.s32.totalorder %s36, 0
      %s39 = sadd.s32 %s38, 1
      %s40 = scalar_select %p37, %s38, %s39
      %p43 = pneg %p37
      %p44 = scmp.eq.s32.totalorder %s16, 3
      %p45 = por %p43, %p44
      %p46 = scmp.ne.s32.totalorder %s38, %s41
      %p47 = scmp.eq.s32.totalorder %s16, 0
      %p48 = por %p46, %p47
      %p49 = scmp.ne.s32.totalorder %s38, %s41
      %p50 = scmp.eq.s32.totalorder %s21, 3
      %p51 = por %p49, %p50
      %p52 = scmp.ne.s32.totalorder %s41, %s42
      %p53 = scmp.eq.s32.totalorder %s21, 0
      %p54 = por %p52, %p53
      %p55 = scmp.ne.s32.totalorder %s41, %s42
      %p56 = scmp.eq.s32.totalorder %s22, 3
      %p57 = por %p55, %p56
      %p59 = scmp.ne.s32.totalorder %s42, %s58
      %p60 = scmp.eq.s32.totalorder %s22, 0
      %p61 = por %p59, %p60
      %s62 = ssub.s32 %s24, %s31
      %p63 = scmp.eq.s32.totalorder %s62, 0
      %s65 = sadd.s32 %s64, 1
      %s66 = scalar_select %p63, %s64, %s65
      %p69 = pneg %p63
      %p70 = scmp.eq.s32.totalorder %s16, 3
      %p71 = por %p69, %p70
      %p72 = scmp.ne.s32.totalorder %s64, %s67
      %p73 = scmp.eq.s32.totalorder %s16, 0
      %p74 = por %p72, %p73
      %p75 = scmp.ne.s32.totalorder %s64, %s67
      %p76 = scmp.eq.s32.totalorder %s21, 3
      %p77 = por %p75, %p76
      %p78 = scmp.ne.s32.totalorder %s67, %s68
      %p79 = scmp.eq.s32.totalorder %s21, 0
      %p80 = por %p78, %p79
      %p81 = scmp.ne.s32.totalorder %s67, %s68
      %p82 = scmp.eq.s32.totalorder %s22, 3
      %p83 = por %p81, %p82
      %p85 = scmp.ne.s32.totalorder %s68, %s84
      %p86 = scmp.eq.s32.totalorder %s22, 0
      %p87 = por %p85, %p86
      %s88 = ssub.s32 %s24, %s31
      %s89 = ssub.s32 %s23, %s35
      %s90 = sor.u32 %s88, %s89
      %p91 = scmp.eq.s32.totalorder %s90, 0
      %s93 = sadd.s32 %s92, 1
      %s94 = scalar_select %p91, %s92, %s93
      %p97 = pneg %p91
      %p98 = scmp.eq.s32.totalorder %s16, 3
      %p99 = por %p97, %p98
      %p100 = scmp.ne.s32.totalorder %s92, %s95
      %p101 = scmp.eq.s32.totalorder %s16, 0
      %p102 = por %p100, %p101
      %p103 = scmp.ne.s32.totalorder %s92, %s95
      %p104 = scmp.eq.s32.totalorder %s21, 3
      %p105 = por %p103, %p104
      %p106 = scmp.ne.s32.totalorder %s95, %s96
      %p107 = scmp.eq.s32.totalorder %s21, 0
      %p108 = por %p106, %p107
      %p109 = scmp.ne.s32.totalorder %s95, %s96
      %p110 = scmp.eq.s32.totalorder %s22, 3
      %p111 = por %p109, %p110
      %p113 = scmp.ne.s32.totalorder %s96, %s112
      %p114 = scmp.eq.s32.totalorder %s22, 0
      %p115 = por %p113, %p114
      %s116 = ssub.s32 %s23, %s35
      %p117 = scmp.eq.s32.totalorder %s116, 0
      %s119 = sadd.s32 %s118, 1
      %s120 = scalar_select %p117, %s118, %s119
      %p123 = pneg %p117
      %p124 = scmp.eq.s32.totalorder %s16, 3
      %p125 = por %p123, %p124
      %p126 = scmp.ne.s32.totalorder %s118, %s121
      %p127 = scmp.eq.s32.totalorder %s16, 0
      %p128 = por %p126, %p127
      %p129 = scmp.ne.s32.totalorder %s118, %s121
      %p130 = scmp.eq.s32.totalorder %s21, 3
      %p131 = por %p129, %p130
      %p132 = scmp.ne.s32.totalorder %s121, %s122
      %p133 = scmp.eq.s32.totalorder %s21, 0
      %p134 = por %p132, %p133
      %p135 = scmp.ne.s32.totalorder %s121, %s122
      %p136 = scmp.eq.s32.totalorder %s22, 3
      %p137 = por %p135, %p136
      %p139 = scmp.ne.s32.totalorder %s122, %s138
      %p140 = scmp.eq.s32.totalorder %s22, 0
      %p141 = por %p139, %p140
      %p142 = scmp.le.s32.totalorder 1, %s16
      %p143 = scmp.lt.s32.totalorder %s16, 5
      %p144 = pnand %p142, %p143
      %p145 = pneg %p144
      // Predicated region
      $region9: #{tpu_custom_call.1} parent=5 // pred_check
        _
      $region10: #{tpu_custom_call.1} parent=5 // pred_check_branch
        %147 = sbr.rel (%p144) target = $region12
      $region11: #{tpu_custom_call.1} parent=5 // pred_region
        %s148 = ssub.s32 %s16, 1
      $region12: #{tpu_custom_call.1} parent=5 // pred_fallthru
        _
      %p149 = scmp.lt.s32.totalorder %s16, 4
      // Predicated region
      $region13: #{tpu_custom_call.1} parent=5 // pred_check
        %p150 = pneg %p149
      $region14: #{tpu_custom_call.1} parent=5 // pred_check_branch
        %152 = sbr.rel (%p150) target = $region16
      $region15: #{tpu_custom_call.1} parent=5 // pred_region
        // Predicated region
        $region17: #{tpu_custom_call.1} parent=15 // pred_check
          %p153 = pneg %p48
        $region18: #{tpu_custom_call.1} parent=15 // pred_check_branch
          %155 = sbr.rel (%p153) target = $region20
        $region19: #{tpu_custom_call.1} parent=15 // pred_region
          %s156 = sand.u32 %s38, 1
          %s157 = scalar_lea.sflag [#allocation3], %s156
          %s158 = sand.u32 %s38, 1
          %s159 = smul.addr %s158, 64
          %s160 = scalar_lea.vmem [#allocation2], %s159
          %s162 = ssub.s32 1024, 1024
          %163 = vsyncadd %s157, %s162
          %s164 = smul.addr %s24, 16
          %s165 = smul.addr %s164, 64
          %s166 = scalar_lea.hbm %s0, %s165
          %s167 = sshll.u32 %s160, 4
          %s168 = int_to_ptr.vmem [resolvable:$true] %s167
          %173 = dma.hbm_to_vmem [thread:$0]  %s166, 1024, %s168, %s157, 64, 64, 4
        $region20: #{tpu_custom_call.1} parent=15 // pred_fallthru
          _
        // Predicated region
        $region21: #{tpu_custom_call.1} parent=15 // pred_check
          %p174 = pneg %p74
        $region22: #{tpu_custom_call.1} parent=15 // pred_check_branch
          %176 = sbr.rel (%p174) target = $region24
        $region23: #{tpu_custom_call.1} parent=15 // pred_region
          %s177 = sand.u32 %s16, 1
          %s178 = scalar_lea.sflag [#allocation6], %s177
          %s179 = sand.u32 %s64, 1
          %s180 = smul.addr %s179, 64
          %s181 = scalar_lea.vmem [#allocation5], %s180
          %s183 = ssub.s32 1024, 1024
          %184 = vsyncadd %s178, %s183
          %s185 = smul.addr %s24, 16
          %s186 = smul.addr %s185, 64
          %s187 = scalar_lea.hbm %s1, %s186
          %s188 = sshll.u32 %s181, 4
          %s189 = int_to_ptr.vmem [resolvable:$true] %s188
          %194 = dma.hbm_to_vmem [thread:$0]  %s187, 1024, %s189, %s178, 64, 64, 4
        $region24: #{tpu_custom_call.1} parent=15 // pred_fallthru
          _
        // Predicated region
        $region25: #{tpu_custom_call.1} parent=15 // pred_check
          %p195 = pneg %p102
        $region26: #{tpu_custom_call.1} parent=15 // pred_check_branch
          %197 = sbr.rel (%p195) target = $region28
        $region27: #{tpu_custom_call.1} parent=15 // pred_region
          %s198 = sand.u32 %s16, 1
          %s199 = scalar_lea.sflag [#allocation6], %s198
          %s200 = sand.u32 %s92, 1
          %s201 = smul.addr %s200, 128
          %s202 = scalar_lea.vmem [#allocation7], %s201
          %s203 = smul.u32 32, %s23
          %s205 = ssub.s32 2048, 2048
          %206 = vsyncadd %s199, %s205
          %s207 = smul.addr %s24, 32
          %s208 = sadd.s32 %s203, %s207
          %s209 = smul.addr %s208, 64
          %s210 = scalar_lea.hbm %s2, %s209
          %s211 = sshll.u32 %s202, 4
          %s212 = int_to_ptr.vmem [resolvable:$true] %s211
          %217 = dma.hbm_to_vmem [thread:$0]  %s210, 2048, %s212, %s199, 64, 64, 4
        $region28: #{tpu_custom_call.1} parent=15 // pred_fallthru
          _
      $region16: #{tpu_custom_call.1} parent=5 // pred_fallthru
        _
      %p218 = scmp.le.s32.totalorder 1, %s16
      %p219 = scmp.lt.s32.totalorder %s16, 5
      %p220 = pnand %p218, %p219
      %p221 = pneg %p220
      // Predicated region
      $region29: #{tpu_custom_call.1} parent=5 // pred_check
        _
      $region30: #{tpu_custom_call.1} parent=5 // pred_check_branch
        %223 = sbr.rel (%p220) target = $region32
      $region31: #{tpu_custom_call.1} parent=5 // pred_region
        %s224 = ssub.s32 %s16, 1
        %s225 = sand.u32 %s41, 1
        %s226 = scalar_lea.sflag [#allocation3], %s225
        %s227 = sand.u32 %s41, 1
        %s228 = smul.addr %s227, 64
        %s229 = scalar_lea.vmem [#allocation2], %s228
        // Predicated region
        $region33: #{tpu_custom_call.1} parent=31 // pred_check
          %p230 = pneg %p54
        $region34: #{tpu_custom_call.1} parent=31 // pred_check_branch
          %232 = sbr.rel (%p230) target = $region36
        $region35: #{tpu_custom_call.1} parent=31 // pred_region
          %233 = dma.done %s226, 1024
        $region36: #{tpu_custom_call.1} parent=31 // pred_fallthru
          _
        %s234 = sand.u32 %s21, 1
        %s235 = scalar_lea.sflag [#allocation6], %s234
        %s236 = sand.u32 %s67, 1
        %s237 = smul.addr %s236, 64
        %s238 = scalar_lea.vmem [#allocation5], %s237
        // Predicated region
        $region37: #{tpu_custom_call.1} parent=31 // pred_check
          %p239 = pneg %p80
        $region38: #{tpu_custom_call.1} parent=31 // pred_check_branch
          %241 = sbr.rel (%p239) target = $region40
        $region39: #{tpu_custom_call.1} parent=31 // pred_region
          %242 = dma.done %s235, 1024
        $region40: #{tpu_custom_call.1} parent=31 // pred_fallthru
          _
        %s243 = sand.u32 %s21, 1
        %s244 = scalar_lea.sflag [#allocation6], %s243
        %s245 = sand.u32 %s95, 1
        %s246 = smul.addr %s245, 128
        %s247 = scalar_lea.vmem [#allocation7], %s246
        // Predicated region
        $region41: #{tpu_custom_call.1} parent=31 // pred_check
          %p248 = pneg %p108
        $region42: #{tpu_custom_call.1} parent=31 // pred_check_branch
          %250 = sbr.rel (%p248) target = $region44
        $region43: #{tpu_custom_call.1} parent=31 // pred_region
          %251 = dma.done %s244, 2048
        $region44: #{tpu_custom_call.1} parent=31 // pred_fallthru
          _
        %s252 = sand.u32 %s41, 1
        %s253 = scalar_lea.sflag [#allocation3], %s252
        %s254 = sand.u32 %s41, 1
        %s255 = smul.addr %s254, 64
        %s256 = scalar_lea.vmem [#allocation2], %s255
        %p257 = pneg %p54
        %p258 = pneg %p51
        %s259 = sand.u32 %s21, 1
        %s260 = scalar_lea.sflag [#allocation6], %s259
        %s261 = sand.u32 %s67, 1
        %s262 = smul.addr %s261, 64
        %s263 = scalar_lea.vmem [#allocation5], %s262
        %p264 = pneg %p80
        %p265 = pneg %p77
        %s266 = sand.u32 %s21, 1
        %s267 = scalar_lea.sflag [#allocation6], %s266
        %s268 = sand.u32 %s95, 1
        %s269 = smul.addr %s268, 128
        %s270 = scalar_lea.vmem [#allocation7], %s269
        %p271 = pneg %p108
        %p272 = pneg %p105
        %p273 = pneg %p134
        %p274 = pneg %p131
        %s275 = smul.u32 32, %s25
        %s276 = smul.u32 32, %s25
        %p278 = scmp.eq.s32.totalorder %s26, 0
        // Predicated region
        $region45: #{tpu_custom_call.1} parent=31 // pred_check
          %p279 = pneg %p278
        $region46: #{tpu_custom_call.1} parent=31 // pred_check_branch
          %281 = sbr.rel (%p279) target = $region48
        $region47: #{tpu_custom_call.1} parent=31 // pred_region
          %282 = vst [vmem:[#allocation8] sm:$0xff] 0.0
          %283 = vst [vmem:[#allocation8 + $0x8] sm:$0xff] 0.0
          %284 = vst [vmem:[#allocation8 + $0x10] sm:$0xff] 0.0
          %285 = vst [vmem:[#allocation8 + $0x18] sm:$0xff] 0.0
          %286 = vst [vmem:[#allocation8 + $0x20] sm:$0xff] 0.0
          %287 = vst [vmem:[#allocation8 + $0x28] sm:$0xff] 0.0
          %288 = vst [vmem:[#allocation8 + $0x30] sm:$0xff] 0.0
          %289 = vst [vmem:[#allocation8 + $0x38] sm:$0xff] 0.0
          %290 = vst [vmem:[#allocation8 + $0x40] sm:$0xff] 0.0
          %291 = vst [vmem:[#allocation8 + $0x48] sm:$0xff] 0.0
          %292 = vst [vmem:[#allocation8 + $0x50] sm:$0xff] 0.0
          %293 = vst [vmem:[#allocation8 + $0x58] sm:$0xff] 0.0
          %294 = vst [vmem:[#allocation8 + $0x60] sm:$0xff] 0.0
          %295 = vst [vmem:[#allocation8 + $0x68] sm:$0xff] 0.0
          %296 = vst [vmem:[#allocation8 + $0x70] sm:$0xff] 0.0
          %297 = vst [vmem:[#allocation8 + $0x78] sm:$0xff] 0.0
          %298 = vst [vmem:[#allocation8 + $0x80] sm:$0xff] 0.0
          %299 = vst [vmem:[#allocation8 + $0x88] sm:$0xff] 0.0
          %300 = vst [vmem:[#allocation8 + $0x90] sm:$0xff] 0.0
          %301 = vst [vmem:[#allocation8 + $0x98] sm:$0xff] 0.0
          %302 = vst [vmem:[#allocation8 + $0xa0] sm:$0xff] 0.0
          %303 = vst [vmem:[#allocation8 + $0xa8] sm:$0xff] 0.0
          %304 = vst [vmem:[#allocation8 + $0xb0] sm:$0xff] 0.0
          %305 = vst [vmem:[#allocation8 + $0xb8] sm:$0xff] 0.0
          %306 = vst [vmem:[#allocation8 + $0xc0] sm:$0xff] 0.0
          %307 = vst [vmem:[#allocation8 + $0xc8] sm:$0xff] 0.0
          %308 = vst [vmem:[#allocation8 + $0xd0] sm:$0xff] 0.0
          %309 = vst [vmem:[#allocation8 + $0xd8] sm:$0xff] 0.0
          %310 = vst [vmem:[#allocation8 + $0xe0] sm:$0xff] 0.0
          %311 = vst [vmem:[#allocation8 + $0xe8] sm:$0xff] 0.0
          %312 = vst [vmem:[#allocation8 + $0xf0] sm:$0xff] 0.0
          %313 = vst [vmem:[#allocation8 + $0xf8] sm:$0xff] 0.0
        $region48: #{tpu_custom_call.1} parent=31 // pred_fallthru
          _
        %v314 = vld [vmem:[%s229] sm:$0xf]
        %v315 = vld [vmem:[%s229 + $0x4] sm:$0xf]
        %v316 = vld [vmem:[%s229 + $0x8] sm:$0xf]
        %v317 = vld [vmem:[%s229 + $0xc] sm:$0xf]
        %v318 = vld [vmem:[%s229 + $0x10] sm:$0xf]
        %v319 = vld [vmem:[%s229 + $0x14] sm:$0xf]
        %v320 = vld [vmem:[%s229 + $0x18] sm:$0xf]
        %v321 = vld [vmem:[%s229 + $0x1c] sm:$0xf]
        %v322 = vld [vmem:[%s229 + $0x20] sm:$0xf]
        %v323 = vld [vmem:[%s229 + $0x24] sm:$0xf]
        %v324 = vld [vmem:[%s229 + $0x28] sm:$0xf]
        %v325 = vld [vmem:[%s229 + $0x2c] sm:$0xf]
        %v326 = vld [vmem:[%s229 + $0x30] sm:$0xf]
        %v327 = vld [vmem:[%s229 + $0x34] sm:$0xf]
        %v328 = vld [vmem:[%s229 + $0x38] sm:$0xf]
        %v329 = vld [vmem:[%s229 + $0x3c] sm:$0xf]
        %v330 = vld [vmem:[%s238] sm:$0xf]
        %v331 = vld [vmem:[%s238 + $0x4] sm:$0xf]
        %v332 = vld [vmem:[%s238 + $0x8] sm:$0xf]
        %v333 = vld [vmem:[%s238 + $0xc] sm:$0xf]
        %v334 = vld [vmem:[%s238 + $0x10] sm:$0xf]
        %v335 = vld [vmem:[%s238 + $0x14] sm:$0xf]
        %v336 = vld [vmem:[%s238 + $0x18] sm:$0xf]
        %v337 = vld [vmem:[%s238 + $0x1c] sm:$0xf]
        %v338 = vld [vmem:[%s238 + $0x20] sm:$0xf]
        %v339 = vld [vmem:[%s238 + $0x24] sm:$0xf]
        %v340 = vld [vmem:[%s238 + $0x28] sm:$0xf]
        %v341 = vld [vmem:[%s238 + $0x2c] sm:$0xf]
        %v342 = vld [vmem:[%s238 + $0x30] sm:$0xf]
        %v343 = vld [vmem:[%s238 + $0x34] sm:$0xf]
        %v344 = vld [vmem:[%s238 + $0x38] sm:$0xf]
        %v345 = vld [vmem:[%s238 + $0x3c] sm:$0xf]
        %v362 = vunpack.c.l.b16 %v314
        %v363 = vunpack.c.l.b16 %v315
        %v364 = vunpack.c.l.b16 %v316
        %v365 = vunpack.c.l.b16 %v317
        %v366 = vunpack.c.l.b16 %v318
        %v367 = vunpack.c.l.b16 %v319
        %v368 = vunpack.c.l.b16 %v320
        %v369 = vunpack.c.l.b16 %v321
        %v370 = vunpack.c.l.b16 %v322
        %v371 = vunpack.c.l.b16 %v323
        %v372 = vunpack.c.l.b16 %v324
        %v373 = vunpack.c.l.b16 %v325
        %v374 = vunpack.c.l.b16 %v326
        %v375 = vunpack.c.l.b16 %v327
        %v376 = vunpack.c.l.b16 %v328
        %v377 = vunpack.c.l.b16 %v329
        %v378 = vpack.c.b16 %v363, %v362
        %v379 = vpack.c.b16 %v365, %v364
        %v380 = vpack.c.b16 %v367, %v366
        %v381 = vpack.c.b16 %v369, %v368
        %v382 = vpack.c.b16 %v371, %v370
        %v383 = vpack.c.b16 %v373, %v372
        %v384 = vpack.c.b16 %v375, %v374
        %v385 = vpack.c.b16 %v377, %v376
        %v410 = vunpack.c.l.b16 %v330
        %v411 = vunpack.c.l.b16 %v331
        %v412 = vunpack.c.l.b16 %v332
        %v413 = vunpack.c.l.b16 %v333
        %v414 = vunpack.c.l.b16 %v334
        %v415 = vunpack.c.l.b16 %v335
        %v416 = vunpack.c.l.b16 %v336
        %v417 = vunpack.c.l.b16 %v337
        %v418 = vunpack.c.l.b16 %v338
        %v419 = vunpack.c.l.b16 %v339
        %v420 = vunpack.c.l.b16 %v340
        %v421 = vunpack.c.l.b16 %v341
        %v422 = vunpack.c.l.b16 %v342
        %v423 = vunpack.c.l.b16 %v343
        %v424 = vunpack.c.l.b16 %v344
        %v425 = vunpack.c.l.b16 %v345
        %v426 = vpack.c.b16 %v411, %v410
        %v427 = vpack.c.b16 %v413, %v412
        %v428 = vpack.c.b16 %v415, %v414
        %v429 = vpack.c.b16 %v417, %v416
        %v430 = vpack.c.b16 %v419, %v418
        %v431 = vpack.c.b16 %v421, %v420
        %v432 = vpack.c.b16 %v423, %v422
        %v433 = vpack.c.b16 %v425, %v424
        %442 = vmatprep.subr.bf16.mxu0 0
        %443 = vmatpush1.bf16.msra.mxu0 %v433
        %444 = vmatprep.subr.bf16.mxu0 0
        %445 = vmatpush1.bf16.msra.mxu0 %v432
        %446 = vmatprep.subr.bf16.mxu0 0
        %447 = vmatpush1.bf16.msra.mxu0 %v431
        %448 = vmatprep.subr.bf16.mxu0 0
        %449 = vmatpush1.bf16.msra.mxu0 %v430
        %450 = vmatprep.subr.bf16.mxu0 0
        %451 = vmatpush1.bf16.msra.mxu0 %v429
        %452 = vmatprep.subr.bf16.mxu0 0
        %453 = vmatpush1.bf16.msra.mxu0 %v428
        %454 = vmatprep.subr.bf16.mxu0 0
        %455 = vmatpush1.bf16.msra.mxu0 %v427
        %456 = vmatprep.subr.bf16.mxu0 0
        %457 = vmatpush1.bf16.msra.mxu0 %v426
        %458 = vmatprep.subr.bf16.mxu0 0
        %459 = vmatpush2.bf16.msra.mxu0 0
        %460 = vmatprep.subr.bf16.mxu0 0
        %461 = vmatpush2.bf16.msra.mxu0 0
        %462 = vmatprep.subr.bf16.mxu0 0
        %463 = vmatpush2.bf16.msra.mxu0 0
        %464 = vmatprep.subr.bf16.mxu0 0
        %465 = vmatpush2.bf16.msra.mxu0 0
        %466 = vmatprep.subr.bf16.mxu0 0
        %467 = vmatpush2.bf16.msra.mxu0 0
        %468 = vmatprep.subr.bf16.mxu0 0
        %469 = vmatpush2.bf16.msra.mxu0 0
        %470 = vmatprep.subr.bf16.mxu0 0
        %471 = vmatpush2.bf16.msra.mxu0 0
        %472 = vmatprep.subr.bf16.mxu0 0
        %473 = vmatpush2.bf16.msra.mxu0 0
        %474 = vmatprep.mubr.bf16.mxu0 0
        %475 = vmatmul.mubr.bf16.gmra.mxu0 %v378
        %v476 = vpop.f32.mrf.mxu0
        %v477 = vadd.f32 0.0, %v476
        %v478 = vpop.f32.mrf.mxu0
        %v479 = vpop.f32.mrf.mxu0
        %v480 = vadd.f32 0.0, %v479
        %v481 = vpop.f32.mrf.mxu0
        %482 = vmatprep.mubr.bf16.mxu0 0
        %483 = vmatmul.mubr.bf16.gmra.mxu0 %v379
        %v484 = vpop.f32.mrf.mxu0
        %v485 = vadd.f32 0.0, %v484
        %v486 = vpop.f32.mrf.mxu0
        %v487 = vpop.f32.mrf.mxu0
        %v488 = vadd.f32 0.0, %v487
        %v489 = vpop.f32.mrf.mxu0
        %490 = vmatprep.mubr.bf16.mxu0 0
        %491 = vmatmul.mubr.bf16.gmra.mxu0 %v380
        %v492 = vpop.f32.mrf.mxu0
        %v493 = vadd.f32 0.0, %v492
        %v494 = vpop.f32.mrf.mxu0
        %v495 = vpop.f32.mrf.mxu0
        %v496 = vadd.f32 0.0, %v495
        %v497 = vpop.f32.mrf.mxu0
        %498 = vmatprep.mubr.bf16.mxu0 0
        %499 = vmatmul.mubr.bf16.gmra.mxu0 %v381
        %v500 = vpop.f32.mrf.mxu0
        %v501 = vadd.f32 0.0, %v500
        %v502 = vpop.f32.mrf.mxu0
        %v503 = vpop.f32.mrf.mxu0
        %v504 = vadd.f32 0.0, %v503
        %v505 = vpop.f32.mrf.mxu0
        %506 = vmatprep.mubr.bf16.mxu0 0
        %507 = vmatmul.mubr.bf16.gmra.mxu0 %v382
        %v508 = vpop.f32.mrf.mxu0
        %v509 = vadd.f32 0.0, %v508
        %v510 = vpop.f32.mrf.mxu0
        %v511 = vpop.f32.mrf.mxu0
        %v512 = vadd.f32 0.0, %v511
        %v513 = vpop.f32.mrf.mxu0
        %514 = vmatprep.mubr.bf16.mxu0 0
        %515 = vmatmul.mubr.bf16.gmra.mxu0 %v383
        %v516 = vpop.f32.mrf.mxu0
        %v517 = vadd.f32 0.0, %v516
        %v518 = vpop.f32.mrf.mxu0
        %v519 = vpop.f32.mrf.mxu0
        %v520 = vadd.f32 0.0, %v519
        %v521 = vpop.f32.mrf.mxu0
        %522 = vmatprep.mubr.bf16.mxu0 0
        %523 = vmatmul.mubr.bf16.gmra.mxu0 %v384
        %v524 = vpop.f32.mrf.mxu0
        %v525 = vadd.f32 0.0, %v524
        %v526 = vpop.f32.mrf.mxu0
        %v527 = vpop.f32.mrf.mxu0
        %v528 = vadd.f32 0.0, %v527
        %v529 = vpop.f32.mrf.mxu0
        %530 = vmatprep.mubr.bf16.mxu0 0
        %531 = vmatmul.mubr.bf16.gmra.mxu0 %v385
        %v532 = vpop.f32.mrf.mxu0
        %v533 = vadd.f32 0.0, %v532
        %v534 = vpop.f32.mrf.mxu0
        %v535 = vpop.f32.mrf.mxu0
        %v536 = vadd.f32 0.0, %v535
        %v537 = vpop.f32.mrf.mxu0
        %538 = vdwg.mxu0
        %v539 = vld [vmem:[#allocation8] sm:$0xff]
        %v540 = vld [vmem:[#allocation8 + $0x8] sm:$0xff]
        %v541 = vld [vmem:[#allocation8 + $0x10] sm:$0xff]
        %v542 = vld [vmem:[#allocation8 + $0x18] sm:$0xff]
        %v543 = vld [vmem:[#allocation8 + $0x20] sm:$0xff]
        %v544 = vld [vmem:[#allocation8 + $0x28] sm:$0xff]
        %v545 = vld [vmem:[#allocation8 + $0x30] sm:$0xff]
        %v546 = vld [vmem:[#allocation8 + $0x38] sm:$0xff]
        %v547 = vld [vmem:[#allocation8 + $0x40] sm:$0xff]
        %v548 = vld [vmem:[#allocation8 + $0x48] sm:$0xff]
        %v549 = vld [vmem:[#allocation8 + $0x50] sm:$0xff]
        %v550 = vld [vmem:[#allocation8 + $0x58] sm:$0xff]
        %v551 = vld [vmem:[#allocation8 + $0x60] sm:$0xff]
        %v552 = vld [vmem:[#allocation8 + $0x68] sm:$0xff]
        %v553 = vld [vmem:[#allocation8 + $0x70] sm:$0xff]
        %v554 = vld [vmem:[#allocation8 + $0x78] sm:$0xff]
        %v555 = vld [vmem:[#allocation8 + $0x80] sm:$0xff]
        %v556 = vld [vmem:[#allocation8 + $0x88] sm:$0xff]
        %v557 = vld [vmem:[#allocation8 + $0x90] sm:$0xff]
        %v558 = vld [vmem:[#allocation8 + $0x98] sm:$0xff]
        %v559 = vld [vmem:[#allocation8 + $0xa0] sm:$0xff]
        %v560 = vld [vmem:[#allocation8 + $0xa8] sm:$0xff]
        %v561 = vld [vmem:[#allocation8 + $0xb0] sm:$0xff]
        %v562 = vld [vmem:[#allocation8 + $0xb8] sm:$0xff]
        %v563 = vld [vmem:[#allocation8 + $0xc0] sm:$0xff]
        %v564 = vld [vmem:[#allocation8 + $0xc8] sm:$0xff]
        %v565 = vld [vmem:[#allocation8 + $0xd0] sm:$0xff]
        %v566 = vld [vmem:[#allocation8 + $0xd8] sm:$0xff]
        %v567 = vld [vmem:[#allocation8 + $0xe0] sm:$0xff]
        %v568 = vld [vmem:[#allocation8 + $0xe8] sm:$0xff]
        %v569 = vld [vmem:[#allocation8 + $0xf0] sm:$0xff]
        %v570 = vld [vmem:[#allocation8 + $0xf8] sm:$0xff]
        %v571 = vld [vmem:[%s247] sm:$0xf]
        %v572 = vld [vmem:[%s247 + $0x4] sm:$0xf]
        %v573 = vld [vmem:[%s247 + $0x8] sm:$0xf]
        %v574 = vld [vmem:[%s247 + $0xc] sm:$0xf]
        %v575 = vld [vmem:[%s247 + $0x10] sm:$0xf]
        %v576 = vld [vmem:[%s247 + $0x14] sm:$0xf]
        %v577 = vld [vmem:[%s247 + $0x18] sm:$0xf]
        %v578 = vld [vmem:[%s247 + $0x1c] sm:$0xf]
        %v579 = vld [vmem:[%s247 + $0x20] sm:$0xf]
        %v580 = vld [vmem:[%s247 + $0x24] sm:$0xf]
        %v581 = vld [vmem:[%s247 + $0x28] sm:$0xf]
        %v582 = vld [vmem:[%s247 + $0x2c] sm:$0xf]
        %v583 = vld [vmem:[%s247 + $0x30] sm:$0xf]
        %v584 = vld [vmem:[%s247 + $0x34] sm:$0xf]
        %v585 = vld [vmem:[%s247 + $0x38] sm:$0xf]
        %v586 = vld [vmem:[%s247 + $0x3c] sm:$0xf]
        %v587 = vld [vmem:[%s247 + $0x40] sm:$0xf]
        %v588 = vld [vmem:[%s247 + $0x44] sm:$0xf]
        %v589 = vld [vmem:[%s247 + $0x48] sm:$0xf]
        %v590 = vld [vmem:[%s247 + $0x4c] sm:$0xf]
        %v591 = vld [vmem:[%s247 + $0x50] sm:$0xf]
        %v592 = vld [vmem:[%s247 + $0x54] sm:$0xf]
        %v593 = vld [vmem:[%s247 + $0x58] sm:$0xf]
        %v594 = vld [vmem:[%s247 + $0x5c] sm:$0xf]
        %v595 = vld [vmem:[%s247 + $0x60] sm:$0xf]
        %v596 = vld [vmem:[%s247 + $0x64] sm:$0xf]
        %v597 = vld [vmem:[%s247 + $0x68] sm:$0xf]
        %v598 = vld [vmem:[%s247 + $0x6c] sm:$0xf]
        %v599 = vld [vmem:[%s247 + $0x70] sm:$0xf]
        %v600 = vld [vmem:[%s247 + $0x74] sm:$0xf]
        %v601 = vld [vmem:[%s247 + $0x78] sm:$0xf]
        %v602 = vld [vmem:[%s247 + $0x7c] sm:$0xf]
        %v603 = vpack.c.bf16 %v480, %v477
        %v604 = vpack.c.bf16 %v488, %v485
        %v605 = vpack.c.bf16 %v496, %v493
        %v606 = vpack.c.bf16 %v504, %v501
        %v607 = vpack.c.bf16 %v512, %v509
        %v608 = vpack.c.bf16 %v520, %v517
        %v609 = vpack.c.bf16 %v528, %v525
        %v610 = vpack.c.bf16 %v536, %v533
        %v643 = vunpack.c.l.b16 %v571
        %v644 = vunpack.c.l.b16 %v572
        %v645 = vunpack.c.l.b16 %v573
        %v646 = vunpack.c.l.b16 %v574
        %v647 = vunpack.c.l.b16 %v575
        %v648 = vunpack.c.l.b16 %v576
        %v649 = vunpack.c.l.b16 %v577
        %v650 = vunpack.c.l.b16 %v578
        %v651 = vunpack.c.l.b16 %v579
        %v652 = vunpack.c.l.b16 %v580
        %v653 = vunpack.c.l.b16 %v581
        %v654 = vunpack.c.l.b16 %v582
        %v655 = vunpack.c.l.b16 %v583
        %v656 = vunpack.c.l.b16 %v584
        %v657 = vunpack.c.l.b16 %v585
        %v658 = vunpack.c.l.b16 %v586
        %v659 = vunpack.c.l.b16 %v587
        %v660 = vunpack.c.l.b16 %v588
        %v661 = vunpack.c.l.b16 %v589
        %v662 = vunpack.c.l.b16 %v590
        %v663 = vunpack.c.l.b16 %v591
        %v664 = vunpack.c.l.b16 %v592
        %v665 = vunpack.c.l.b16 %v593
        %v666 = vunpack.c.l.b16 %v594
        %v667 = vunpack.c.l.b16 %v595
        %v668 = vunpack.c.l.b16 %v596
        %v669 = vunpack.c.l.b16 %v597
        %v670 = vunpack.c.l.b16 %v598
        %v671 = vunpack.c.l.b16 %v599
        %v672 = vunpack.c.l.b16 %v600
        %v673 = vunpack.c.l.b16 %v601
        %v674 = vunpack.c.l.b16 %v602
        %v675 = vpack.c.b16 %v644, %v643
        %v676 = vpack.c.b16 %v646, %v645
        %v677 = vpack.c.b16 %v648, %v647
        %v678 = vpack.c.b16 %v650, %v649
        %v679 = vpack.c.b16 %v652, %v651
        %v680 = vpack.c.b16 %v654, %v653
        %v681 = vpack.c.b16 %v656, %v655
        %v682 = vpack.c.b16 %v658, %v657
        %v683 = vpack.c.b16 %v660, %v659
        %v684 = vpack.c.b16 %v662, %v661
        %v685 = vpack.c.b16 %v664, %v663
        %v686 = vpack.c.b16 %v666, %v665
        %v687 = vpack.c.b16 %v668, %v667
        %v688 = vpack.c.b16 %v670, %v669
        %v689 = vpack.c.b16 %v672, %v671
        %v690 = vpack.c.b16 %v674, %v673
        %707 = vmatprep.subr.bf16.mxu0 0
        %708 = vmatpush1.bf16.msra.mxu0 %v610
        %709 = vmatprep.subr.bf16.mxu0 0
        %710 = vmatpush1.bf16.msra.mxu0 %v609
        %711 = vmatprep.subr.bf16.mxu0 0
        %712 = vmatpush1.bf16.msra.mxu0 %v608
        %713 = vmatprep.subr.bf16.mxu0 0
        %714 = vmatpush1.bf16.msra.mxu0 %v607
        %715 = vmatprep.subr.bf16.mxu0 0
        %716 = vmatpush1.bf16.msra.mxu0 %v606
        %717 = vmatprep.subr.bf16.mxu0 0
        %718 = vmatpush1.bf16.msra.mxu0 %v605
        %719 = vmatprep.subr.bf16.mxu0 0
        %720 = vmatpush1.bf16.msra.mxu0 %v604
        %721 = vmatprep.subr.bf16.mxu0 0
        %722 = vmatpush1.bf16.msra.mxu0 %v603
        %723 = vmatprep.subr.bf16.mxu0 0
        %724 = vmatpush2.bf16.msra.mxu0 0
        %725 = vmatprep.subr.bf16.mxu0 0
        %726 = vmatpush2.bf16.msra.mxu0 0
        %727 = vmatprep.subr.bf16.mxu0 0
        %728 = vmatpush2.bf16.msra.mxu0 0
        %729 = vmatprep.subr.bf16.mxu0 0
        %730 = vmatpush2.bf16.msra.mxu0 0
        %731 = vmatprep.subr.bf16.mxu0 0
        %732 = vmatpush2.bf16.msra.mxu0 0
        %733 = vmatprep.subr.bf16.mxu0 0
        %734 = vmatpush2.bf16.msra.mxu0 0
        %735 = vmatprep.subr.bf16.mxu0 0
        %736 = vmatpush2.bf16.msra.mxu0 0
        %737 = vmatprep.subr.bf16.mxu0 0
        %738 = vmatpush2.bf16.msra.mxu0 0
        %739 = vmatprep.mubr.bf16.mxu0 0
        %740 = vmatmul.mubr.bf16.gmra.mxu0 %v675
        %v741 = vpop.f32.mrf.mxu0
        %v742 = vadd.f32 0.0, %v741
        %v743 = vpop.f32.mrf.mxu0
        %v744 = vpop.f32.mrf.mxu0
        %v745 = vadd.f32 0.0, %v744
        %v746 = vpop.f32.mrf.mxu0
        %747 = vmatprep.mubr.bf16.mxu0 0
        %748 = vmatmul.mubr.bf16.gmra.mxu0 %v676
        %v749 = vpop.f32.mrf.mxu0
        %v750 = vadd.f32 0.0, %v749
        %v751 = vpop.f32.mrf.mxu0
        %v752 = vpop.f32.mrf.mxu0
        %v753 = vadd.f32 0.0, %v752
        %v754 = vpop.f32.mrf.mxu0
        %755 = vmatprep.mubr.bf16.mxu0 0
        %756 = vmatmul.mubr.bf16.gmra.mxu0 %v677
        %v757 = vpop.f32.mrf.mxu0
        %v758 = vadd.f32 0.0, %v757
        %v759 = vpop.f32.mrf.mxu0
        %v760 = vpop.f32.mrf.mxu0
        %v761 = vadd.f32 0.0, %v760
        %v762 = vpop.f32.mrf.mxu0
        %763 = vmatprep.mubr.bf16.mxu0 0
        %764 = vmatmul.mubr.bf16.gmra.mxu0 %v678
        %v765 = vpop.f32.mrf.mxu0
        %v766 = vadd.f32 0.0, %v765
        %v767 = vpop.f32.mrf.mxu0
        %v768 = vpop.f32.mrf.mxu0
        %v769 = vadd.f32 0.0, %v768
        %v770 = vpop.f32.mrf.mxu0
        %771 = vmatprep.mubr.bf16.mxu0 0
        %772 = vmatmul.mubr.bf16.gmra.mxu0 %v679
        %v773 = vpop.f32.mrf.mxu0
        %v774 = vadd.f32 0.0, %v773
        %v775 = vpop.f32.mrf.mxu0
        %v776 = vpop.f32.mrf.mxu0
        %v777 = vadd.f32 0.0, %v776
        %v778 = vpop.f32.mrf.mxu0
        %779 = vmatprep.mubr.bf16.mxu0 0
        %780 = vmatmul.mubr.bf16.gmra.mxu0 %v680
        %v781 = vpop.f32.mrf.mxu0
        %v782 = vadd.f32 0.0, %v781
        %v783 = vpop.f32.mrf.mxu0
        %v784 = vpop.f32.mrf.mxu0
        %v785 = vadd.f32 0.0, %v784
        %v786 = vpop.f32.mrf.mxu0
        %787 = vmatprep.mubr.bf16.mxu0 0
        %788 = vmatmul.mubr.bf16.gmra.mxu0 %v681
        %v789 = vpop.f32.mrf.mxu0
        %v790 = vadd.f32 0.0, %v789
        %v791 = vpop.f32.mrf.mxu0
        %v792 = vpop.f32.mrf.mxu0
        %v793 = vadd.f32 0.0, %v792
        %v794 = vpop.f32.mrf.mxu0
        %795 = vmatprep.mubr.bf16.mxu0 0
        %796 = vmatmul.mubr.bf16.gmra.mxu0 %v682
        %v797 = vpop.f32.mrf.mxu0
        %v798 = vadd.f32 0.0, %v797
        %v799 = vpop.f32.mrf.mxu0
        %v800 = vpop.f32.mrf.mxu0
        %v801 = vadd.f32 0.0, %v800
        %v802 = vpop.f32.mrf.mxu0
        %803 = vmatprep.mubr.bf16.mxu0 0
        %804 = vmatmul.mubr.bf16.gmra.mxu0 %v683
        %v805 = vpop.f32.mrf.mxu0
        %v806 = vadd.f32 0.0, %v805
        %v807 = vpop.f32.mrf.mxu0
        %v808 = vpop.f32.mrf.mxu0
        %v809 = vadd.f32 0.0, %v808
        %v810 = vpop.f32.mrf.mxu0
        %811 = vmatprep.mubr.bf16.mxu0 0
        %812 = vmatmul.mubr.bf16.gmra.mxu0 %v684
        %v813 = vpop.f32.mrf.mxu0
        %v814 = vadd.f32 0.0, %v813
        %v815 = vpop.f32.mrf.mxu0
        %v816 = vpop.f32.mrf.mxu0
        %v817 = vadd.f32 0.0, %v816
        %v818 = vpop.f32.mrf.mxu0
        %819 = vmatprep.mubr.bf16.mxu0 0
        %820 = vmatmul.mubr.bf16.gmra.mxu0 %v685
        %v821 = vpop.f32.mrf.mxu0
        %v822 = vadd.f32 0.0, %v821
        %v823 = vpop.f32.mrf.mxu0
        %v824 = vpop.f32.mrf.mxu0
        %v825 = vadd.f32 0.0, %v824
        %v826 = vpop.f32.mrf.mxu0
        %827 = vmatprep.mubr.bf16.mxu0 0
        %828 = vmatmul.mubr.bf16.gmra.mxu0 %v686
        %v829 = vpop.f32.mrf.mxu0
        %v830 = vadd.f32 0.0, %v829
        %v831 = vpop.f32.mrf.mxu0
        %v832 = vpop.f32.mrf.mxu0
        %v833 = vadd.f32 0.0, %v832
        %v834 = vpop.f32.mrf.mxu0
        %835 = vmatprep.mubr.bf16.mxu0 0
        %836 = vmatmul.mubr.bf16.gmra.mxu0 %v687
        %v837 = vpop.f32.mrf.mxu0
        %v838 = vadd.f32 0.0, %v837
        %v839 = vpop.f32.mrf.mxu0
        %v840 = vpop.f32.mrf.mxu0
        %v841 = vadd.f32 0.0, %v840
        %v842 = vpop.f32.mrf.mxu0
        %843 = vmatprep.mubr.bf16.mxu0 0
        %844 = vmatmul.mubr.bf16.gmra.mxu0 %v688
        %v845 = vpop.f32.mrf.mxu0
        %v846 = vadd.f32 0.0, %v845
        %v847 = vpop.f32.mrf.mxu0
        %v848 = vpop.f32.mrf.mxu0
        %v849 = vadd.f32 0.0, %v848
        %v850 = vpop.f32.mrf.mxu0
        %851 = vmatprep.mubr.bf16.mxu0 0
        %852 = vmatmul.mubr.bf16.gmra.mxu0 %v689
        %v853 = vpop.f32.mrf.mxu0
        %v854 = vadd.f32 0.0, %v853
        %v855 = vpop.f32.mrf.mxu0
        %v856 = vpop.f32.mrf.mxu0
        %v857 = vadd.f32 0.0, %v856
        %v858 = vpop.f32.mrf.mxu0
        %859 = vmatprep.mubr.bf16.mxu0 0
        %860 = vmatmul.mubr.bf16.gmra.mxu0 %v690
        %v861 = vpop.f32.mrf.mxu0
        %v862 = vadd.f32 0.0, %v861
        %v863 = vpop.f32.mrf.mxu0
        %v864 = vpop.f32.mrf.mxu0
        %v865 = vadd.f32 0.0, %v864
        %v866 = vpop.f32.mrf.mxu0
        %867 = vdwg.mxu0
        %v868 = vadd.f32 %v539, %v742
        %v869 = vadd.f32 %v540, %v745
        %v870 = vadd.f32 %v541, %v750
        %v871 = vadd.f32 %v542, %v753
        %v872 = vadd.f32 %v543, %v758
        %v873 = vadd.f32 %v544, %v761
        %v874 = vadd.f32 %v545, %v766
        %v875 = vadd.f32 %v546, %v769
        %v876 = vadd.f32 %v547, %v774
        %v877 = vadd.f32 %v548, %v777
        %v878 = vadd.f32 %v549, %v782
        %v879 = vadd.f32 %v550, %v785
        %v880 = vadd.f32 %v551, %v790
        %v881 = vadd.f32 %v552, %v793
        %v882 = vadd.f32 %v553, %v798
        %v883 = vadd.f32 %v554, %v801
        %v884 = vadd.f32 %v555, %v806
        %v885 = vadd.f32 %v556, %v809
        %v886 = vadd.f32 %v557, %v814
        %v887 = vadd.f32 %v558, %v817
        %v888 = vadd.f32 %v559, %v822
        %v889 = vadd.f32 %v560, %v825
        %v890 = vadd.f32 %v561, %v830
        %v891 = vadd.f32 %v562, %v833
        %v892 = vadd.f32 %v563, %v838
        %v893 = vadd.f32 %v564, %v841
        %v894 = vadd.f32 %v565, %v846
        %v895 = vadd.f32 %v566, %v849
        %v896 = vadd.f32 %v567, %v854
        %v897 = vadd.f32 %v568, %v857
        %v898 = vadd.f32 %v569, %v862
        %v899 = vadd.f32 %v570, %v865
        %900 = vst [vmem:[#allocation8] sm:$0xff] %v868
        %901 = vst [vmem:[#allocation8 + $0x8] sm:$0xff] %v869
        %902 = vst [vmem:[#allocation8 + $0x10] sm:$0xff] %v870
        %903 = vst [vmem:[#allocation8 + $0x18] sm:$0xff] %v871
        %904 = vst [vmem:[#allocation8 + $0x20] sm:$0xff] %v872
        %905 = vst [vmem:[#allocation8 + $0x28] sm:$0xff] %v873
        %906 = vst [vmem:[#allocation8 + $0x30] sm:$0xff] %v874
        %907 = vst [vmem:[#allocation8 + $0x38] sm:$0xff] %v875
        %908 = vst [vmem:[#allocation8 + $0x40] sm:$0xff] %v876
        %909 = vst [vmem:[#allocation8 + $0x48] sm:$0xff] %v877
        %910 = vst [vmem:[#allocation8 + $0x50] sm:$0xff] %v878
        %911 = vst [vmem:[#allocation8 + $0x58] sm:$0xff] %v879
        %912 = vst [vmem:[#allocation8 + $0x60] sm:$0xff] %v880
        %913 = vst [vmem:[#allocation8 + $0x68] sm:$0xff] %v881
        %914 = vst [vmem:[#allocation8 + $0x70] sm:$0xff] %v882
        %915 = vst [vmem:[#allocation8 + $0x78] sm:$0xff] %v883
        %916 = vst [vmem:[#allocation8 + $0x80] sm:$0xff] %v884
        %917 = vst [vmem:[#allocation8 + $0x88] sm:$0xff] %v885
        %918 = vst [vmem:[#allocation8 + $0x90] sm:$0xff] %v886
        %919 = vst [vmem:[#allocation8 + $0x98] sm:$0xff] %v887
        %920 = vst [vmem:[#allocation8 + $0xa0] sm:$0xff] %v888
        %921 = vst [vmem:[#allocation8 + $0xa8] sm:$0xff] %v889
        %922 = vst [vmem:[#allocation8 + $0xb0] sm:$0xff] %v890
        %923 = vst [vmem:[#allocation8 + $0xb8] sm:$0xff] %v891
        %924 = vst [vmem:[#allocation8 + $0xc0] sm:$0xff] %v892
        %925 = vst [vmem:[#allocation8 + $0xc8] sm:$0xff] %v893
        %926 = vst [vmem:[#allocation8 + $0xd0] sm:$0xff] %v894
        %927 = vst [vmem:[#allocation8 + $0xd8] sm:$0xff] %v895
        %928 = vst [vmem:[#allocation8 + $0xe0] sm:$0xff] %v896
        %929 = vst [vmem:[#allocation8 + $0xe8] sm:$0xff] %v897
        %930 = vst [vmem:[#allocation8 + $0xf0] sm:$0xff] %v898
        %931 = vst [vmem:[#allocation8 + $0xf8] sm:$0xff] %v899
        // Predicated region
        $region49: #{tpu_custom_call.1} parent=31 // pred_check
          %p932 = pneg %p131
        $region50: #{tpu_custom_call.1} parent=31 // pred_check_branch
          %934 = sbr.rel (%p932) target = $region52
        $region51: #{tpu_custom_call.1} parent=31 // pred_region
          %s935 = smul.u32 32, %s25
          %s937 = ssub.s32 4096, 4096
          %938 = vsyncadd [#allocation4], %s937
          %s939 = smul.addr %s935, 128
          %s940 = scalar_lea.hbm %s3, %s939
          %s941 = sshll.u32 [#allocation8], 4
          %s942 = int_to_ptr.vmem [resolvable:$true] %s941
          %947 = dma.vmem_to_hbm [thread:$0]  %s942, 4096, %s940, [#allocation4], 128, 128, 8
        $region52: #{tpu_custom_call.1} parent=31 // pred_fallthru
          _
        // Predicated region
        $region53: #{tpu_custom_call.1} parent=31 // pred_check
          %p948 = pneg %p131
        $region54: #{tpu_custom_call.1} parent=31 // pred_check_branch
          %950 = sbr.rel (%p948) target = $region56
        $region55: #{tpu_custom_call.1} parent=31 // pred_region
          %951 = dma.done [#allocation4], 4096
        $region56: #{tpu_custom_call.1} parent=31 // pred_fallthru
          _
      $region32: #{tpu_custom_call.1} parent=5 // pred_fallthru
        _
      %p952 = scmp.le.s32.totalorder 2, %s16
      // Predicated region
      $region57: #{tpu_custom_call.1} parent=5 // pred_check
        %p953 = pneg %p952
      $region58: #{tpu_custom_call.1} parent=5 // pred_check_branch
        %955 = sbr.rel (%p953) target = $region60
      $region59: #{tpu_custom_call.1} parent=5 // pred_region
        %s956 = ssub.s32 %s16, 2
      $region60: #{tpu_custom_call.1} parent=5 // pred_fallthru
        _
    $region6: #{tpu_custom_call.1} parent=1 // loop_footer
      %s20 = sadd.s32 1, %s16
    $region7: #{tpu_custom_call.1} parent=1 // loop_footer_branch
      %15 = sbr.rel target = $region3
    $region8: #{tpu_custom_call.1} parent=1 // loop_exit
      _
    %957 = vsyncpa [#allocation3], 1
    %s958 = scalar_lea.sflag [#allocation3], 1
    %959 = vsyncpa %s958, 1
    %960 = vsyncpa [#allocation6], 1
    %s961 = scalar_lea.sflag [#allocation6], 1
    %962 = vsyncpa %s961, 1
    %963 = vsyncpa [#allocation4], 1
    %s964 = scalar_lea.sflag [#allocation4], 1
    %965 = vsyncpa %s964, 1

</llo_original>
